<compile_context>
chip_gen: v5e
topology: v5e:2x2
jax: 0.10.0
libtpu: 0.0.40
codegen_flags: <defaults>
</compile_context>

<pallas_src>
import functools

import jax
import jax.numpy as jnp
import numpy as np
from jax.experimental import pallas as pl
from jax.experimental.pallas import tpu as pltpu

EPS_COMBINE = float(np.finfo(float).eps)  # matches torch code's np.finfo(float).eps


def _round_up(n, m):
    return ((n + m - 1) // m) * m


def _tpu_hw():
    """Physical VMEM bytes and whether the chip has 2 TensorCores (megacore / v7x)."""
    vmem_cap = 64 * 2**20          # conservative fallback (v7x size) works everywhere
    two_cores = False
    try:
        info = pltpu.get_tpu_info()
        vmem_cap = int(getattr(info, "vmem_capacity_bytes", vmem_cap))
    except Exception:
        pass
    try:
        kind = jax.devices()[0].device_kind.lower()
        two_cores = ("v4" in kind) or ("7" in kind)
    except Exception:
        pass
    return vmem_cap, two_cores


def _wset_bytes(D, TB, TF):
    """Rough per-step VMEM working set (double-buffered tiles + resident blocks)."""
    w = 2 * 2 * (D * TF + TF * D)        # double-buffered bf16 w1 + w2 tiles
    b = 2 * 4 * (TF + D)                 # double-buffered f32 b1 + b2 tiles
    xg = 2 * (4 * TB * D + 4 * TB)       # double-buffered f32 x block + per-slot gate
    y = 2 * 4 * TB * D                   # f32 output block (resident accumulator)
    h = 6 * TB * TF                      # f32 h + bf16 copy of h
    return w + b + xg + y + h


def _pick_tb(B_pad, D, budget, two_cores):
    """Largest token block that divides B_pad, fits the budget, and keeps T >= 2 on 2-TC chips."""
    cap = B_pad // 2 if (two_cores and B_pad >= 16) else B_pad
    for p in (1024, 512, 256, 128, 64, 32, 16, 8):
        if p <= cap and B_pad % p == 0 and 12 * p * D + 6 * p * 128 <= budget // 2:
            return p
    return 8


def _pick_tf(F, D, TB, budget):
    """Largest MXU-friendly d_ff tile whose working set fits the VMEM budget."""
    cands = [c for c in (4096, 2048, 1024, 512, 256, 128) if c <= F and F % c == 0]
    if not cands:
        cands = [F]                       # full dim satisfies the (8,128) rule
    for tf in cands:
        wset = _wset_bytes(D, TB, tf)
        if wset <= budget:
            return tf, wset
    tf = cands[-1]
    return tf, _wset_bytes(D, TB, tf)


# -------------------------- expert FFN + combine kernel --------------------------
def _moe_expert_kernel(ids_ref, cnt_ref, x_ref, g_ref, w1_ref, b1_ref, w2_ref, b2_ref,
                       y_ref):
    t = pl.program_id(0)          # token block
    f = pl.program_id(1)          # d_ff tile
    j = pl.program_id(2)          # active-expert slot (innermost -> padded-slot DMAs elide)
    nf = pl.num_programs(1)
    nj = pl.num_programs(2)
    del ids_ref                   # only drives the data-dependent weight index_maps

    @pl.when((f == 0) & (j == 0))
    def _():
        y_ref[...] = jnp.zeros_like(y_ref)          # y block is the resident accumulator

    active = j < cnt_ref[t]                         # padded slots: compute skipped

    @pl.when(active)
    def _():
        x = x_ref[...].astype(jnp.bfloat16)                          # (TB, D) bf16 MXU feed
        g = g_ref[...]                                               # (TB, 1) gate, f32
        h = jnp.dot(x, w1_ref[...], preferred_element_type=jnp.float32) + b1_ref[...]
        h = jnp.maximum(h, 0.0)                                      # ReLU
        # TODO(synk): nn.Dropout(0.1) is treated as identity (eval-mode); training-mode
        # Bernoulli masking is stochastic and intentionally not reproduced here.
        y_ref[...] += g * jnp.dot(h.astype(jnp.bfloat16), w2_ref[...],
                                  preferred_element_type=jnp.float32)

    @pl.when(active & (f == 0))
    def _():
        y_ref[...] += g_ref[...] * b2_ref[...]       # add b2 once per active expert

    @pl.when((f == nf - 1) & (j == nj - 1))
    def _():
        y = y_ref[...]
        y_ref[...] = jnp.where(y == 0.0, EPS_COMBINE, y)   # combined[combined == 0] = eps


def moe_expert_combine(x, w1, b1, w2, b2, gates, k):
    B, D = x.shape
    E, _, F = w1.shape

    vmem_cap, two_cores = _tpu_hw()
    budget = int(vmem_cap * 0.65)          # leave headroom for compiler scratch / spills

    B_pad = _round_up(B, 8)
    TB = _pick_tb(B_pad, D, budget, two_cores)
    TF, wset = _pick_tf(F, D, TB, budget)
    T = B_pad // TB
    NF = F // TF
    n_slots = int(min(E, TB * k))          # max distinct active experts per token block

    x_pad = jnp.pad(x, ((0, B_pad - B), (0, 0)))
    gates_pad = jnp.pad(gates, ((0, B_pad - B), (0, 0)))

    # Per token block: ascending list of experts with any nonzero gate, padded by
    # repeating the last active id (repeat => identical block index => DMA elided),
    # plus the per-block active count for pl.when compute-skip.
    gates_blk = gates_pad.reshape(T, TB, E)
    block_active = (gates_blk > 0).any(axis=1)                                  # (T, E)
    counts = block_active.sum(axis=1).astype(jnp.int32)                         # (T,)
    order = jnp.argsort(jnp.logical_not(block_active).astype(jnp.int32),
                        axis=1, stable=True).astype(jnp.int32)                  # active first
    pad_id = jnp.take_along_axis(order, jnp.maximum(counts - 1, 0)[:, None], axis=1)
    slot_pos = jnp.arange(n_slots, dtype=jnp.int32)[None, :]
    expert_ids2d = jnp.where(slot_pos < counts[:, None], order[:, :n_slots], pad_id)
    expert_ids = expert_ids2d.reshape(-1)                                       # (T*S,)

    # Pre-gathered per-slot gates: gates_sorted[t, j, :, 0] = gates[block t, :, ids[t, j]].
    gates_sorted = jnp.take_along_axis(jnp.transpose(gates_blk, (0, 2, 1)),
                                       expert_ids2d[:, :, None], axis=1)        # (T, S, TB)
    gates_sorted = gates_sorted[..., None].astype(jnp.float32)                  # (T, S, TB, 1)

    w1b = w1.astype(jnp.bfloat16)          # bf16 weights: MXU-native, half the HBM bytes
    w2b = w2.astype(jnp.bfloat16)
    b1r = b1[:, None, :].astype(jnp.float32)   # (E, 1, F)
    b2r = b2[:, None, :].astype(jnp.float32)   # (E, 1, D)

    def w1_map(t, f, j, ids, cnt): return (ids[t * n_slots + j], 0, f)
    def b1_map(t, f, j, ids, cnt): return (ids[t * n_slots + j], 0, f)
    def w2_map(t, f, j, ids, cnt): return (ids[t * n_slots + j], f, 0)
    def b2_map(t, f, j, ids, cnt): return (ids[t * n_slots + j], 0, 0)
    def tok_map(t, f, j, ids, cnt): return (t, 0)
    def gate_map(t, f, j, ids, cnt): return (t, j, 0, 0)

    vmem_limit = int(min(vmem_cap - (4 * 2**20), max(32 * 2**20, int(1.5 * wset))))

    y_pad = pl.pallas_call(
        _moe_expert_kernel,
        out_shape=jax.ShapeDtypeStruct((B_pad, D), jnp.float32),
        grid_spec=pltpu.PrefetchScalarGridSpec(
            num_scalar_prefetch=2,
            grid=(T, NF, n_slots),
            in_specs=[pl.BlockSpec((TB, D), tok_map),               # x (f32, cast in-kernel)
                      pl.BlockSpec((None, None, TB, 1), gate_map),  # per-slot gates
                      pl.BlockSpec((None, D, TF), w1_map),          # w1 (bf16)
                      pl.BlockSpec((None, 1, TF), b1_map),          # b1 (f32)
                      pl.BlockSpec((None, TF, D), w2_map),          # w2 (bf16)
                      pl.BlockSpec((None, 1, D), b2_map)],          # b2 (f32)
            out_specs=pl.BlockSpec((TB, D), tok_map)),
        compiler_params=pltpu.CompilerParams(
            dimension_semantics=("parallel", "arbitrary", "arbitrary"),
            vmem_limit_bytes=vmem_limit),
    )(expert_ids, counts, x_pad, gates_sorted, w1b, b1r, w2b, b2r)
    return y_pad[:B]


# ------------------------------- gating glue (JAX) -------------------------------
def cv_squared(v):
    eps = 1e-10
    if v.shape[0] == 1:
        return jnp.zeros(())
    return jnp.var(v, ddof=1) / (jnp.mean(v) ** 2 + eps)  # torch .var() is unbiased


def noisy_top_k_gating(x, w_gate, w_noise, k, noise_key, train=True, noise_epsilon=0.01):
    B = x.shape[0]
    E = w_gate.shape[1]
    # Tiny (B,D)@(D,E) matmuls: plain XLA. A pallas_call here would pay fixed overhead and
    # a 2E-wide lane-sparse (masked) output store for negligible compute.
    clean_logits = jnp.dot(x, w_gate)
    raw_noise_stddev = jnp.dot(x, w_noise)
    noise_stddev = (jax.nn.softplus(raw_noise_stddev) + noise_epsilon) * (1.0 if train else 0.0)
    noisy_logits = clean_logits + jax.random.normal(noise_key, clean_logits.shape,
                                                    jnp.float32) * noise_stddev
    logits = noisy_logits  # noisy_gating=True

    kk = min(k + 1, E)
    top_logits, top_indices = jax.lax.top_k(logits, kk)
    top_k_logits = top_logits[:, :k]
    top_k_indices = top_indices[:, :k]
    top_k_gates = jax.nn.softmax(top_k_logits, axis=1)
    gates = jnp.zeros((B, E), jnp.float32)
    gates = gates.at[jnp.arange(B)[:, None], top_k_indices].set(top_k_gates)

    # Guard on `train`: with train=False, noise_stddev == 0 and the _prob_in_top_k path
    # would divide by zero (inf/NaN load & loss). Fall back to (gates > 0) load counts.
    if k < E and train:
        threshold_if_in = top_logits[:, k][:, None]
        threshold_if_out = top_logits[:, k - 1][:, None]
        is_in = noisy_logits > threshold_if_in
        prob_if_in = jax.scipy.stats.norm.cdf((clean_logits - threshold_if_in) / noise_stddev)
        prob_if_out = jax.scipy.stats.norm.cdf((clean_logits - threshold_if_out) / noise_stddev)
        load = jnp.where(is_in, prob_if_in, prob_if_out).sum(0)
    else:
        load = (gates > 0).sum(0).astype(jnp.float32)
    return gates, load


@functools.partial(jax.jit, static_argnames=("k", "train", "loss_coef"))
def moe_forward(x, params, noise_key, k=2, train=True, loss_coef=0.1):
    gates, load = noisy_top_k_gating(x, params["w_gate"], params["w_noise"], k,
                                     noise_key, train=train)
    importance = gates.sum(0)
    loss = (cv_squared(importance) + cv_squared(load)) * loss_coef
    y = moe_expert_combine(x, params["w1"], params["b1"], params["w2"], params["b2"],
                           gates, k)
    return y, loss


# -------------------------------------- main --------------------------------------
if __name__ == "__main__":
    # Small but MXU/vreg-aligned demo shapes (lane dims multiples of 128).
    B, D_MODEL, D_FF, E, K = 16, 128, 256, 4, 2

    key = jax.random.PRNGKey(0)
    kx, k1, k2, k3, k4, knoise = jax.random.split(key, 6)

    # nn.Linear default init: U(-1/sqrt(fan_in), 1/sqrt(fan_in)); w_gate / w_noise are zeros.
    lim1 = 1.0 / np.sqrt(D_MODEL)
    lim2 = 1.0 / np.sqrt(D_FF)
    params = {
        "w_gate": jnp.zeros((D_MODEL, E), jnp.float32),
        "w_noise": jnp.zeros((D_MODEL, E), jnp.float32),
        "w1": jax.random.uniform(k1, (E, D_MODEL, D_FF), jnp.float32, -lim1, lim1),
        "b1": jax.random.uniform(k2, (E, D_FF), jnp.float32, -lim1, lim1),
        "w2": jax.random.uniform(k3, (E, D_FF, D_MODEL), jnp.float32, -lim2, lim2),
        "b2": jax.random.uniform(k4, (E, D_MODEL), jnp.float32, -lim2, lim2),
    }
    x = jax.random.normal(kx, (B, D_MODEL), jnp.float32)

    y, loss = moe_forward(x, params, knoise, k=K, train=True, loss_coef=0.1)
    y, loss = jax.block_until_ready((y, loss))

    # Pure-JAX reference of the dense-equivalent expert path (same bf16 cast points).
    gates_ref, _ = noisy_top_k_gating(x, params["w_gate"], params["w_noise"], K, knoise)
    xb = x.astype(jnp.bfloat16)
    y_ref = jnp.zeros((B, D_MODEL), jnp.float32)
    for e in range(E):
        h = jnp.dot(xb, params["w1"][e].astype(jnp.bfloat16),
                    preferred_element_type=jnp.float32) + params["b1"][e]
        h = jnp.maximum(h, 0.0)
        fe = jnp.dot(h.astype(jnp.bfloat16), params["w2"][e].astype(jnp.bfloat16),
                     preferred_element_type=jnp.float32) + params["b2"][e]
        y_ref = y_ref + gates_ref[:, e:e + 1] * fe
    y_ref = jnp.where(y_ref == 0.0, EPS_COMBINE, y_ref)

    assert y.shape == (B, D_MODEL) and loss.shape == ()
    assert bool(jnp.isfinite(loss))
    np.testing.assert_allclose(np.asarray(y), np.asarray(y_ref), rtol=1e-3, atol=1e-3)

    print("KERNEL_OK")
</pallas_src>

<mosaic_0001>
module attributes {stable_mosaic.version = 11 : i64} {
  func.func @_moe_expert_kernel(%arg0: i32, %arg1: i32, %arg2: i32, %arg3: memref<4xi32, #tpu.memory_space<smem>>, %arg4: memref<1xi32, #tpu.memory_space<smem>>, %arg5: memref<16x128xf32, #tpu.memory_space<vmem>>, %arg6: memref<1x1x16x1xf32, #tpu.memory_space<vmem>>, %arg7: memref<1x128x256xbf16, #tpu.memory_space<vmem>>, %arg8: memref<1x1x256xf32, #tpu.memory_space<vmem>>, %arg9: memref<1x256x128xbf16, #tpu.memory_space<vmem>>, %arg10: memref<1x1x128xf32, #tpu.memory_space<vmem>>, %arg11: memref<16x128xf32, #tpu.memory_space<vmem>>) attributes {dimension_semantics = [#tpu.dimension_semantics<parallel>, #tpu.dimension_semantics<arbitrary>, #tpu.dimension_semantics<arbitrary>], iteration_bounds = array<i64: 1, 1, 4>, scalar_prefetch = 2 : i64, scratch_operands = 0 : i64, tpu.core_type = #tpu.core_type<tc>, window_params = [{transform_indices = @transform_0, window_bounds = array<i64: 16, 128>}, {transform_indices = @transform_1, window_bounds = array<i64: 1, 1, 16, 1>}, {transform_indices = @transform_2, window_bounds = array<i64: 1, 128, 256>}, {transform_indices = @transform_3, window_bounds = array<i64: 1, 1, 256>}, {transform_indices = @transform_4, window_bounds = array<i64: 1, 256, 128>}, {transform_indices = @transform_5, window_bounds = array<i64: 1, 1, 128>}, {transform_indices = @transform_6, window_bounds = array<i64: 16, 128>}]} {
    %c0_i32 = arith.constant 0 : i32
    %0 = arith.cmpi eq, %arg1, %c0_i32 : i32
    %c0_i32_0 = arith.constant 0 : i32
    %1 = arith.cmpi eq, %arg2, %c0_i32_0 : i32
    %2 = arith.andi %0, %1 : i1
    %3 = arith.extui %2 : i1 to i32
    %c0_i32_1 = arith.constant 0 : i32
    %4 = arith.cmpi ne, %3, %c0_i32_1 : i32
    scf.if %4 {
      %cst = arith.constant 0.000000e+00 : f32
      %19 = vector.broadcast %cst : f32 to vector<16x128xf32>
      %c0 = arith.constant 0 : index
      %c0_7 = arith.constant 0 : index
      %20 = vector.load %arg11[%c0, %c0_7] : memref<16x128xf32, #tpu.memory_space<vmem>>, vector<16x128xf32>
      tpu.vector_store %arg11[%c0, %c0_7], %19 {strides = array<i32>} : memref<16x128xf32, #tpu.memory_space<vmem>>, vector<16x128xf32>,
    } else {
    }
    %5 = arith.index_cast %arg0 : i32 to index
    %6 = memref.load %arg4[%5] : memref<1xi32, #tpu.memory_space<smem>>
    %7 = arith.cmpi slt, %arg2, %6 : i32
    %8 = arith.extui %7 : i1 to i32
    %c0_i32_2 = arith.constant 0 : i32
    %9 = arith.cmpi ne, %8, %c0_i32_2 : i32
    scf.if %9 {
      %c0 = arith.constant 0 : index
      %c0_7 = arith.constant 0 : index
      %19 = vector.load %arg5[%c0, %c0_7] : memref<16x128xf32, #tpu.memory_space<vmem>>, vector<16x128xf32>
      %20 = arith.truncf %19 : vector<16x128xf32> to vector<16x128xbf16>
      %c0_8 = arith.constant 0 : index
      %c0_9 = arith.constant 0 : index
      %c0_10 = arith.constant 0 : index
      %c0_11 = arith.constant 0 : index
      %21 = vector.load %arg6[%c0_8, %c0_9, %c0_10, %c0_11] : memref<1x1x16x1xf32, #tpu.memory_space<vmem>>, vector<1x1x16x1xf32>
      %22 = vector.shape_cast %21 : vector<1x1x16x1xf32> to vector<16x1xf32>
      %c0_12 = arith.constant 0 : index
      %c0_13 = arith.constant 0 : index
      %c0_14 = arith.constant 0 : index
      %23 = vector.load %arg7[%c0_12, %c0_13, %c0_14] : memref<1x128x256xbf16, #tpu.memory_space<vmem>>, vector<1x128x256xbf16>
      %24 = vector.shape_cast %23 : vector<1x128x256xbf16> to vector<128x256xbf16>
      %cst = arith.constant dense<0.000000e+00> : vector<16x256xf32>
      %25 = tpu.matmul %20, %24, %cst {dimension_numbers = #tpu.dot_dimension_numbers<[1], [0], [0], [1], [0, 0, 1, 1], [], []>} : vector<16x128xbf16>, vector<128x256xbf16>, vector<16x256xf32> -> vector<16x256xf32>
      %c0_15 = arith.constant 0 : index
      %c0_16 = arith.constant 0 : index
      %c0_17 = arith.constant 0 : index
      %26 = vector.load %arg8[%c0_15, %c0_16, %c0_17] : memref<1x1x256xf32, #tpu.memory_space<vmem>>, vector<1x1x256xf32>
      %27 = vector.shape_cast %26 : vector<1x1x256xf32> to vector<1x256xf32>
      %28 = vector.broadcast %27 : vector<1x256xf32> to vector<16x256xf32>
      %29 = arith.addf %25, %28 : vector<16x256xf32>
      %cst_18 = arith.constant 0.000000e+00 : f32
      %30 = vector.broadcast %cst_18 : f32 to vector<16x256xf32>
      %31 = arith.maximumf %29, %30 : vector<16x256xf32>
      %c0_19 = arith.constant 0 : index
      %c0_20 = arith.constant 0 : index
      %32 = vector.load %arg11[%c0_19, %c0_20] : memref<16x128xf32, #tpu.memory_space<vmem>>, vector<16x128xf32>
      %33 = arith.truncf %31 : vector<16x256xf32> to vector<16x256xbf16>
      %c0_21 = arith.constant 0 : index
      %c0_22 = arith.constant 0 : index
      %c0_23 = arith.constant 0 : index
      %34 = vector.load %arg9[%c0_21, %c0_22, %c0_23] : memref<1x256x128xbf16, #tpu.memory_space<vmem>>, vector<1x256x128xbf16>
      %35 = vector.shape_cast %34 : vector<1x256x128xbf16> to vector<256x128xbf16>
      %cst_24 = arith.constant dense<0.000000e+00> : vector<16x128xf32>
      %36 = tpu.matmul %33, %35, %cst_24 {dimension_numbers = #tpu.dot_dimension_numbers<[1], [0], [0], [1], [0, 0, 1, 1], [], []>} : vector<16x256xbf16>, vector<256x128xbf16>, vector<16x128xf32> -> vector<16x128xf32>
      %37 = vector.broadcast %22 : vector<16x1xf32> to vector<16x128xf32>
      %38 = arith.mulf %37, %36 : vector<16x128xf32>
      %39 = arith.addf %32, %38 : vector<16x128xf32>
      %c0_25 = arith.constant 0 : index
      %c0_26 = arith.constant 0 : index
      %40 = vector.load %arg11[%c0_25, %c0_26] : memref<16x128xf32, #tpu.memory_space<vmem>>, vector<16x128xf32>
      tpu.vector_store %arg11[%c0_25, %c0_26], %39 {strides = array<i32>} : memref<16x128xf32, #tpu.memory_space<vmem>>, vector<16x128xf32>,
    } else {
    }
    %c0_i32_3 = arith.constant 0 : i32
    %10 = arith.cmpi eq, %arg1, %c0_i32_3 : i32
    %11 = arith.andi %7, %10 : i1
    %12 = arith.extui %11 : i1 to i32
    %c0_i32_4 = arith.constant 0 : i32
    %13 = arith.cmpi ne, %12, %c0_i32_4 : i32
    scf.if %13 {
      %c0 = arith.constant 0 : index
      %c0_7 = arith.constant 0 : index
      %19 = vector.load %arg11[%c0, %c0_7] : memref<16x128xf32, #tpu.memory_space<vmem>>, vector<16x128xf32>
      %c0_8 = arith.constant 0 : index
      %c0_9 = arith.constant 0 : index
      %c0_10 = arith.constant 0 : index
      %c0_11 = arith.constant 0 : index
      %20 = vector.load %arg6[%c0_8, %c0_9, %c0_10, %c0_11] : memref<1x1x16x1xf32, #tpu.memory_space<vmem>>, vector<1x1x16x1xf32>
      %21 = vector.shape_cast %20 : vector<1x1x16x1xf32> to vector<16x1xf32>
      %c0_12 = arith.constant 0 : index
      %c0_13 = arith.constant 0 : index
      %c0_14 = arith.constant 0 : index
      %22 = vector.load %arg10[%c0_12, %c0_13, %c0_14] : memref<1x1x128xf32, #tpu.memory_space<vmem>>, vector<1x1x128xf32>
      %23 = vector.shape_cast %22 : vector<1x1x128xf32> to vector<1x128xf32>
      %24 = vector.broadcast %21 : vector<16x1xf32> to vector<16x128xf32>
      %25 = vector.broadcast %23 : vector<1x128xf32> to vector<16x128xf32>
      %26 = arith.mulf %24, %25 : vector<16x128xf32>
      %27 = arith.addf %19, %26 : vector<16x128xf32>
      %c0_15 = arith.constant 0 : index
      %c0_16 = arith.constant 0 : index
      %28 = vector.load %arg11[%c0_15, %c0_16] : memref<16x128xf32, #tpu.memory_space<vmem>>, vector<16x128xf32>
      tpu.vector_store %arg11[%c0_15, %c0_16], %27 {strides = array<i32>} : memref<16x128xf32, #tpu.memory_space<vmem>>, vector<16x128xf32>,
    } else {
    }
    %c0_i32_5 = arith.constant 0 : i32
    %14 = arith.cmpi eq, %arg1, %c0_i32_5 : i32
    %c3_i32 = arith.constant 3 : i32
    %15 = arith.cmpi eq, %arg2, %c3_i32 : i32
    %16 = arith.andi %14, %15 : i1
    %17 = arith.extui %16 : i1 to i32
    %c0_i32_6 = arith.constant 0 : i32
    %18 = arith.cmpi ne, %17, %c0_i32_6 : i32
    scf.if %18 {
      %c0 = arith.constant 0 : index
      %c0_7 = arith.constant 0 : index
      %19 = vector.load %arg11[%c0, %c0_7] : memref<16x128xf32, #tpu.memory_space<vmem>>, vector<16x128xf32>
      %cst = arith.constant 0.000000e+00 : f32
      %20 = vector.broadcast %cst : f32 to vector<16x128xf32>
      %21 = arith.cmpf oeq, %19, %20 : vector<16x128xf32>
      %cst_8 = arith.constant 2.22044605E-16 : f32
      %22 = vector.broadcast %cst_8 : f32 to vector<16x128xf32>
      %23 = arith.select %21, %22, %19 : vector<16x128xi1>, vector<16x128xf32>
      %c0_9 = arith.constant 0 : index
      %c0_10 = arith.constant 0 : index
      %24 = vector.load %arg11[%c0_9, %c0_10] : memref<16x128xf32, #tpu.memory_space<vmem>>, vector<16x128xf32>
      tpu.vector_store %arg11[%c0_9, %c0_10], %23 {strides = array<i32>} : memref<16x128xf32, #tpu.memory_space<vmem>>, vector<16x128xf32>,
    } else {
    }
    return
  }
  func.func @transform_0(%arg0: i32, %arg1: i32, %arg2: i32, %arg3: memref<4xi32, #tpu.memory_space<smem>>, %arg4: memref<1xi32, #tpu.memory_space<smem>>) -> (i32, i32) {
    %c0_i32 = arith.constant 0 : i32
    %c0_i32_0 = arith.constant 0 : i32
    return %arg0, %c0_i32 : i32, i32
  }
  func.func @transform_1(%arg0: i32, %arg1: i32, %arg2: i32, %arg3: memref<4xi32, #tpu.memory_space<smem>>, %arg4: memref<1xi32, #tpu.memory_space<smem>>) -> (i32, i32, i32, i32) {
    %c0_i32 = arith.constant 0 : i32
    %c0_i32_0 = arith.constant 0 : i32
    %c0_i32_1 = arith.constant 0 : i32
    return %arg0, %arg2, %c0_i32, %c0_i32_0 : i32, i32, i32, i32
  }
  func.func @transform_2(%arg0: i32, %arg1: i32, %arg2: i32, %arg3: memref<4xi32, #tpu.memory_space<smem>>, %arg4: memref<1xi32, #tpu.memory_space<smem>>) -> (i32, i32, i32) {
    %c4_i32 = arith.constant 4 : i32
    %0 = arith.muli %arg0, %c4_i32 : i32
    %1 = arith.addi %0, %arg2 : i32
    %2 = arith.index_cast %1 : i32 to index
    %3 = memref.load %arg3[%2] : memref<4xi32, #tpu.memory_space<smem>>
    %c0_i32 = arith.constant 0 : i32
    %c0_i32_0 = arith.constant 0 : i32
    return %3, %c0_i32, %arg1 : i32, i32, i32
  }
  func.func @transform_3(%arg0: i32, %arg1: i32, %arg2: i32, %arg3: memref<4xi32, #tpu.memory_space<smem>>, %arg4: memref<1xi32, #tpu.memory_space<smem>>) -> (i32, i32, i32) {
    %c4_i32 = arith.constant 4 : i32
    %0 = arith.muli %arg0, %c4_i32 : i32
    %1 = arith.addi %0, %arg2 : i32
    %2 = arith.index_cast %1 : i32 to index
    %3 = memref.load %arg3[%2] : memref<4xi32, #tpu.memory_space<smem>>
    %c0_i32 = arith.constant 0 : i32
    %c0_i32_0 = arith.constant 0 : i32
    return %3, %c0_i32, %arg1 : i32, i32, i32
  }
  func.func @transform_4(%arg0: i32, %arg1: i32, %arg2: i32, %arg3: memref<4xi32, #tpu.memory_space<smem>>, %arg4: memref<1xi32, #tpu.memory_space<smem>>) -> (i32, i32, i32) {
    %c4_i32 = arith.constant 4 : i32
    %0 = arith.muli %arg0, %c4_i32 : i32
    %1 = arith.addi %0, %arg2 : i32
    %2 = arith.index_cast %1 : i32 to index
    %3 = memref.load %arg3[%2] : memref<4xi32, #tpu.memory_space<smem>>
    %c0_i32 = arith.constant 0 : i32
    %c0_i32_0 = arith.constant 0 : i32
    return %3, %arg1, %c0_i32 : i32, i32, i32
  }
  func.func @transform_5(%arg0: i32, %arg1: i32, %arg2: i32, %arg3: memref<4xi32, #tpu.memory_space<smem>>, %arg4: memref<1xi32, #tpu.memory_space<smem>>) -> (i32, i32, i32) {
    %c4_i32 = arith.constant 4 : i32
    %0 = arith.muli %arg0, %c4_i32 : i32
    %1 = arith.addi %0, %arg2 : i32
    %2 = arith.index_cast %1 : i32 to index
    %3 = memref.load %arg3[%2] : memref<4xi32, #tpu.memory_space<smem>>
    %c0_i32 = arith.constant 0 : i32
    %c0_i32_0 = arith.constant 0 : i32
    %c0_i32_1 = arith.constant 0 : i32
    return %3, %c0_i32, %c0_i32_0 : i32, i32, i32
  }
  func.func @transform_6(%arg0: i32, %arg1: i32, %arg2: i32, %arg3: memref<4xi32, #tpu.memory_space<smem>>, %arg4: memref<1xi32, #tpu.memory_space<smem>>) -> (i32, i32) {
    %c0_i32 = arith.constant 0 : i32
    %c0_i32_0 = arith.constant 0 : i32
    return %arg0, %c0_i32 : i32, i32
  }
}

</mosaic_0001>

<llo_original>
// kernel: moe_forward.1
$region0: #{moe_forward.1}
  #allocation0 [shape = 'u32[]', space=smem, size = 0x4, offset = 0x4, fixed_abs, tag = 'smem constant byte address 0x4 - core index']
  #allocation1 [shape = 'u32[72,128]{1,0:T(1,128)}', space=vmem, size = 0x9000, scoped, tag = 'internal scratch']
  #allocation2 [shape = 's32[1]{0}', space=sflag, size = 0x4, scoped, tag = 'scoped memory for moe_forward.1']
  #allocation3 [shape = 'u8[512]{0}', space=smem, size = 0x200, scoped, tag = 'prefetched SMEM operand 0']
  #allocation4 [shape = 's32[1]{0:T(128)S(6)}', space=smem, size = 0x200, scoped, tag = 'prefetched SMEM operand 1']
  %s0 = inlined_call_operand.vmem [shape: s32[4], index: 0, kind: input, shape index: {}]
  %s1 = inlined_call_operand.<no memory space> [shape: s32[1], index: 1, kind: input, shape index: {}]
  %s2 = inlined_call_operand.vmem [shape: f32[16,128], index: 2, kind: input, shape index: {}]
  %s3 = inlined_call_operand.vmem [shape: f32[1,4,16,1], index: 3, kind: input, shape index: {}]
  %s4 = inlined_call_operand.vmem [shape: bf16[4,128,256], index: 4, kind: input, shape index: {}]
  %s5 = inlined_call_operand.vmem [shape: f32[4,1,256], index: 5, kind: input, shape index: {}]
  %s6 = inlined_call_operand.vmem [shape: bf16[4,256,128], index: 6, kind: input, shape index: {}]
  %s7 = inlined_call_operand.vmem [shape: f32[4,1,128], index: 7, kind: input, shape index: {}]
  %s8 = inlined_call_operand.hbm [shape: f32[16,128], index: 8, kind: output, shape index: {}]
  %s9 = sld [smem:[#allocation0]]
  $region73: #{moe_forward.1} parent=0
    _
  %s11 = ssub.s32 1, %s9
  %s12 = scalar_select 0, %s11, %s9
  %s14 = sshll.u32 %s0, 4
  %s15 = int_to_ptr.vmem [resolvable:$true] %s14
  %17 = dma.vmem_to_smem %s15, 16, [#allocation3], [#allocation2]
  %18 = sst [smem:[#allocation4]] %s1
  %20 = dma.done [#allocation2], 16
  %21 = sfence
  $region1: #{moe_forward.1} parent=0
    #allocation5 [shape = 'u8[8192]{0}', space=vmem, size = 0x2000, scoped, tag = 'output window, operand 0, single buffered']
    #allocation6 [shape = 's32[2]{0}', space=sflag, size = 0x8, scoped, tag = 'scoped memory for moe_forward.1']
    %22 = vsyncpa [#allocation6], 0
    loop: start=0, step=1, limit=6
    $region2: #{moe_forward.1} parent=1 // loop_pre_header
      _
    $region3: #{moe_forward.1} parent=1 // loop_header
      %s24 = sphi 0, %s28
      %p25 = scmp.ge.s32.totalorder %s24, 6
      %s31 = sphi 0, %s50
      %s32 = sphi 0, %s46
      %s33 = sphi 0, %s42
      %s34 = sphi 0, %s31
      %s35 = sphi 0, %s32
      %s36 = sphi 0, %s33
      %s37 = sphi 0, %s34
      %s38 = sphi 0, %s35
      %s39 = sphi 0, %s36
      %s53 = sphi 0, %s55
      %s56 = sphi 0, %s53
      %s57 = sphi 0, %s56
      %s73 = sphi 0, %s57
      %s81 = sphi 0, %s83
      %s84 = sphi 0, %s81
      %s85 = sphi 0, %s84
      %s101 = sphi 0, %s85
      %s115 = sphi 0, %s117
      %s118 = sphi 0, %s115
      %s119 = sphi 0, %s118
      %s135 = sphi 0, %s119
      %s149 = sphi 0, %s151
      %s152 = sphi 0, %s149
      %s153 = sphi 0, %s152
      %s169 = sphi 0, %s153
      %s183 = sphi 0, %s185
      %s186 = sphi 0, %s183
      %s187 = sphi 0, %s186
      %s203 = sphi 0, %s187
      %s215 = sphi 0, %s217
      %s218 = sphi 0, %s215
      %s219 = sphi 0, %s218
      %s235 = sphi 0, %s219
      %s241 = sphi 0, %s243
      %s244 = sphi 0, %s241
      %s245 = sphi 0, %s244
      %s261 = sphi 0, %s245
    $region4: #{moe_forward.1} parent=1 // loop_header_branch
      %27 = sbr.rel (%p25) target = $region8
    $region5: #{moe_forward.1} parent=1 // loop_body
      %s29 = ssub.s32 %s24, 1
      %s30 = ssub.s32 %s24, 2
      %s40 = sadd.s32 1, %s33
      %p41 = scmp.ge.s32.totalorder %s40, 4
      %s42 = scalar_select %p41, 0, %s40
      %s43 = sadd.s32 1, %s32
      %s44 = scalar_select %p41, %s43, %s32
      %p45 = scmp.ge.s32.totalorder %s44, 1
      %s46 = scalar_select %p45, 0, %s44
      %s47 = sadd.s32 1, %s31
      %s48 = scalar_select %p45, %s47, %s31
      %p49 = scmp.ge.s32.totalorder %s48, 1
      %s50 = scalar_select %p49, 0, %s48
      %s51 = ssub.s32 %s31, %s50
      %p52 = scmp.eq.s32.totalorder %s51, 0
      %s54 = sadd.s32 %s53, 1
      %s55 = scalar_select %p52, %s53, %s54
      %p58 = pneg %p52
      %p59 = scmp.eq.s32.totalorder %s24, 3
      %p60 = por %p58, %p59
      %p61 = scmp.ne.s32.totalorder %s53, %s56
      %p62 = scmp.eq.s32.totalorder %s24, 0
      %p63 = por %p61, %p62
      %p64 = scmp.ne.s32.totalorder %s53, %s56
      %p65 = scmp.eq.s32.totalorder %s29, 3
      %p66 = por %p64, %p65
      %p67 = scmp.ne.s32.totalorder %s56, %s57
      %p68 = scmp.eq.s32.totalorder %s29, 0
      %p69 = por %p67, %p68
      %p70 = scmp.ne.s32.totalorder %s56, %s57
      %p71 = scmp.eq.s32.totalorder %s30, 3
      %p72 = por %p70, %p71
      %p74 = scmp.ne.s32.totalorder %s57, %s73
      %p75 = scmp.eq.s32.totalorder %s30, 0
      %p76 = por %p74, %p75
      %s77 = ssub.s32 %s31, %s50
      %s78 = ssub.s32 %s33, %s42
      %s79 = sor.u32 %s77, %s78
      %p80 = scmp.eq.s32.totalorder %s79, 0
      %s82 = sadd.s32 %s81, 1
      %s83 = scalar_select %p80, %s81, %s82
      %p86 = pneg %p80
      %p87 = scmp.eq.s32.totalorder %s24, 3
      %p88 = por %p86, %p87
      %p89 = scmp.ne.s32.totalorder %s81, %s84
      %p90 = scmp.eq.s32.totalorder %s24, 0
      %p91 = por %p89, %p90
      %p92 = scmp.ne.s32.totalorder %s81, %s84
      %p93 = scmp.eq.s32.totalorder %s29, 3
      %p94 = por %p92, %p93
      %p95 = scmp.ne.s32.totalorder %s84, %s85
      %p96 = scmp.eq.s32.totalorder %s29, 0
      %p97 = por %p95, %p96
      %p98 = scmp.ne.s32.totalorder %s84, %s85
      %p99 = scmp.eq.s32.totalorder %s30, 3
      %p100 = por %p98, %p99
      %p102 = scmp.ne.s32.totalorder %s85, %s101
      %p103 = scmp.eq.s32.totalorder %s30, 0
      %p104 = por %p102, %p103
      %s105 = smul.u32 %s31, 4
      %s106 = sadd.s32 %s105, %s33
      %s107 = sld [smem:[#allocation3 + %s106]]
      %s108 = smul.u32 %s50, 4
      %s109 = sadd.s32 %s108, %s42
      %s110 = sld [smem:[#allocation3 + %s109]]
      %s111 = ssub.s32 %s107, %s110
      %s112 = ssub.s32 %s32, %s46
      %s113 = sor.u32 %s111, %s112
      %p114 = scmp.eq.s32.totalorder %s113, 0
      %s116 = sadd.s32 %s115, 1
      %s117 = scalar_select %p114, %s115, %s116
      %p120 = pneg %p114
      %p121 = scmp.eq.s32.totalorder %s24, 3
      %p122 = por %p120, %p121
      %p123 = scmp.ne.s32.totalorder %s115, %s118
      %p124 = scmp.eq.s32.totalorder %s24, 0
      %p125 = por %p123, %p124
      %p126 = scmp.ne.s32.totalorder %s115, %s118
      %p127 = scmp.eq.s32.totalorder %s29, 3
      %p128 = por %p126, %p127
      %p129 = scmp.ne.s32.totalorder %s118, %s119
      %p130 = scmp.eq.s32.totalorder %s29, 0
      %p131 = por %p129, %p130
      %p132 = scmp.ne.s32.totalorder %s118, %s119
      %p133 = scmp.eq.s32.totalorder %s30, 3
      %p134 = por %p132, %p133
      %p136 = scmp.ne.s32.totalorder %s119, %s135
      %p137 = scmp.eq.s32.totalorder %s30, 0
      %p138 = por %p136, %p137
      %s139 = smul.u32 %s31, 4
      %s140 = sadd.s32 %s139, %s33
      %s141 = sld [smem:[#allocation3 + %s140]]
      %s142 = smul.u32 %s50, 4
      %s143 = sadd.s32 %s142, %s42
      %s144 = sld [smem:[#allocation3 + %s143]]
      %s145 = ssub.s32 %s141, %s144
      %s146 = ssub.s32 %s32, %s46
      %s147 = sor.u32 %s145, %s146
      %p148 = scmp.eq.s32.totalorder %s147, 0
      %s150 = sadd.s32 %s149, 1
      %s151 = scalar_select %p148, %s149, %s150
      %p154 = pneg %p148
      %p155 = scmp.eq.s32.totalorder %s24, 3
      %p156 = por %p154, %p155
      %p157 = scmp.ne.s32.totalorder %s149, %s152
      %p158 = scmp.eq.s32.totalorder %s24, 0
      %p159 = por %p157, %p158
      %p160 = scmp.ne.s32.totalorder %s149, %s152
      %p161 = scmp.eq.s32.totalorder %s29, 3
      %p162 = por %p160, %p161
      %p163 = scmp.ne.s32.totalorder %s152, %s153
      %p164 = scmp.eq.s32.totalorder %s29, 0
      %p165 = por %p163, %p164
      %p166 = scmp.ne.s32.totalorder %s152, %s153
      %p167 = scmp.eq.s32.totalorder %s30, 3
      %p168 = por %p166, %p167
      %p170 = scmp.ne.s32.totalorder %s153, %s169
      %p171 = scmp.eq.s32.totalorder %s30, 0
      %p172 = por %p170, %p171
      %s173 = smul.u32 %s31, 4
      %s174 = sadd.s32 %s173, %s33
      %s175 = sld [smem:[#allocation3 + %s174]]
      %s176 = smul.u32 %s50, 4
      %s177 = sadd.s32 %s176, %s42
      %s178 = sld [smem:[#allocation3 + %s177]]
      %s179 = ssub.s32 %s175, %s178
      %s180 = ssub.s32 %s32, %s46
      %s181 = sor.u32 %s179, %s180
      %p182 = scmp.eq.s32.totalorder %s181, 0
      %s184 = sadd.s32 %s183, 1
      %s185 = scalar_select %p182, %s183, %s184
      %p188 = pneg %p182
      %p189 = scmp.eq.s32.totalorder %s24, 3
      %p190 = por %p188, %p189
      %p191 = scmp.ne.s32.totalorder %s183, %s186
      %p192 = scmp.eq.s32.totalorder %s24, 0
      %p193 = por %p191, %p192
      %p194 = scmp.ne.s32.totalorder %s183, %s186
      %p195 = scmp.eq.s32.totalorder %s29, 3
      %p196 = por %p194, %p195
      %p197 = scmp.ne.s32.totalorder %s186, %s187
      %p198 = scmp.eq.s32.totalorder %s29, 0
      %p199 = por %p197, %p198
      %p200 = scmp.ne.s32.totalorder %s186, %s187
      %p201 = scmp.eq.s32.totalorder %s30, 3
      %p202 = por %p200, %p201
      %p204 = scmp.ne.s32.totalorder %s187, %s203
      %p205 = scmp.eq.s32.totalorder %s30, 0
      %p206 = por %p204, %p205
      %s207 = smul.u32 %s31, 4
      %s208 = sadd.s32 %s207, %s33
      %s209 = sld [smem:[#allocation3 + %s208]]
      %s210 = smul.u32 %s50, 4
      %s211 = sadd.s32 %s210, %s42
      %s212 = sld [smem:[#allocation3 + %s211]]
      %s213 = ssub.s32 %s209, %s212
      %p214 = scmp.eq.s32.totalorder %s213, 0
      %s216 = sadd.s32 %s215, 1
      %s217 = scalar_select %p214, %s215, %s216
      %p220 = pneg %p214
      %p221 = scmp.eq.s32.totalorder %s24, 3
      %p222 = por %p220, %p221
      %p223 = scmp.ne.s32.totalorder %s215, %s218
      %p224 = scmp.eq.s32.totalorder %s24, 0
      %p225 = por %p223, %p224
      %p226 = scmp.ne.s32.totalorder %s215, %s218
      %p227 = scmp.eq.s32.totalorder %s29, 3
      %p228 = por %p226, %p227
      %p229 = scmp.ne.s32.totalorder %s218, %s219
      %p230 = scmp.eq.s32.totalorder %s29, 0
      %p231 = por %p229, %p230
      %p232 = scmp.ne.s32.totalorder %s218, %s219
      %p233 = scmp.eq.s32.totalorder %s30, 3
      %p234 = por %p232, %p233
      %p236 = scmp.ne.s32.totalorder %s219, %s235
      %p237 = scmp.eq.s32.totalorder %s30, 0
      %p238 = por %p236, %p237
      %s239 = ssub.s32 %s31, %s50
      %p240 = scmp.eq.s32.totalorder %s239, 0
      %s242 = sadd.s32 %s241, 1
      %s243 = scalar_select %p240, %s241, %s242
      %p246 = pneg %p240
      %p247 = scmp.eq.s32.totalorder %s24, 3
      %p248 = por %p246, %p247
      %p249 = scmp.ne.s32.totalorder %s241, %s244
      %p250 = scmp.eq.s32.totalorder %s24, 0
      %p251 = por %p249, %p250
      %p252 = scmp.ne.s32.totalorder %s241, %s244
      %p253 = scmp.eq.s32.totalorder %s29, 3
      %p254 = por %p252, %p253
      %p255 = scmp.ne.s32.totalorder %s244, %s245
      %p256 = scmp.eq.s32.totalorder %s29, 0
      %p257 = por %p255, %p256
      %p258 = scmp.ne.s32.totalorder %s244, %s245
      %p259 = scmp.eq.s32.totalorder %s30, 3
      %p260 = por %p258, %p259
      %p262 = scmp.ne.s32.totalorder %s245, %s261
      %p263 = scmp.eq.s32.totalorder %s30, 0
      %p264 = por %p262, %p263
      %p265 = scmp.le.s32.totalorder 1, %s24
      %p266 = scmp.lt.s32.totalorder %s24, 5
      %p267 = pnand %p265, %p266
      %p268 = pneg %p267
      // Predicated region
      $region9: #{moe_forward.1} parent=5 // pred_check
        _
      $region10: #{moe_forward.1} parent=5 // pred_check_branch
        %270 = sbr.rel (%p267) target = $region12
      $region11: #{moe_forward.1} parent=5 // pred_region
        %s271 = ssub.s32 %s24, 1
        // Predicated region
        $region13: #{moe_forward.1} parent=11 // pred_check
          %p272 = pneg %p69
        $region14: #{moe_forward.1} parent=11 // pred_check_branch
          %274 = sbr.rel (%p272) target = $region16
        $region15: #{moe_forward.1} parent=11 // pred_region
          %s275 = smul.u32 2, %s34
          %p276 = scmp.lt.s32.totalorder %s275, 1
          %s277 = scalar_select %p276, %s275, 1
          %s278 = smul.addr %s277, 8
          %s279 = scalar_lea.vmem %s2, %s278
          %s280 = smul.u32 2, %s34
        $region16: #{moe_forward.1} parent=11 // pred_fallthru
          _
      $region12: #{moe_forward.1} parent=5 // pred_fallthru
        _
      %p281 = scmp.lt.s32.totalorder %s24, 4
      // Predicated region
      $region17: #{moe_forward.1} parent=5 // pred_check
        %p282 = pneg %p281
      $region18: #{moe_forward.1} parent=5 // pred_check_branch
        %284 = sbr.rel (%p282) target = $region20
      $region19: #{moe_forward.1} parent=5 // pred_region
        // Predicated region
        $region21: #{moe_forward.1} parent=19 // pred_check
          %p285 = pneg %p91
        $region22: #{moe_forward.1} parent=19 // pred_check_branch
          %287 = sbr.rel (%p285) target = $region24
        $region23: #{moe_forward.1} parent=19 // pred_region
          %p288 = scmp.lt.s32.totalorder %s31, 0
          %s289 = scalar_select %p288, %s31, 0
          %p290 = scmp.lt.s32.totalorder %s33, 3
          %s291 = scalar_select %p290, %s33, 3
          %s292 = smul.addr %s291, 2
          %s293 = smul.addr %s289, 8
          %s294 = sadd.s32 %s292, %s293
          %s295 = smul.addr %s294, 8
          %s296 = scalar_lea.vmem %s3, %s295
        $region24: #{moe_forward.1} parent=19 // pred_fallthru
          _
        // Predicated region
        $region25: #{moe_forward.1} parent=19 // pred_check
          %p297 = pneg %p125
        $region26: #{moe_forward.1} parent=19 // pred_check_branch
          %299 = sbr.rel (%p297) target = $region28
        $region27: #{moe_forward.1} parent=19 // pred_region
          %s300 = smul.u32 %s31, 4
          %s301 = sadd.s32 %s300, %s33
          %s302 = sld [smem:[#allocation3 + %s301]]
          %s303 = smul.u32 2, %s32
          %p304 = scmp.lt.s32.totalorder %s302, 3
          %s305 = scalar_select %p304, %s302, 3
          %p306 = scmp.lt.s32.totalorder %s303, 1
          %s307 = scalar_select %p306, %s303, 1
          %s308 = smul.addr %s305, 32
          %s309 = sadd.s32 %s307, %s308
          %s310 = smul.addr %s309, 4
          %s311 = scalar_lea.vmem %s4, %s310
          %s312 = smul.u32 %s31, 4
          %s313 = sadd.s32 %s312, %s33
          %s314 = sld [smem:[#allocation3 + %s313]]
          %s315 = smul.u32 2, %s32
        $region28: #{moe_forward.1} parent=19 // pred_fallthru
          _
        // Predicated region
        $region29: #{moe_forward.1} parent=19 // pred_check
          %p316 = pneg %p159
        $region30: #{moe_forward.1} parent=19 // pred_check_branch
          %318 = sbr.rel (%p316) target = $region32
        $region31: #{moe_forward.1} parent=19 // pred_region
          %s319 = smul.u32 %s31, 4
          %s320 = sadd.s32 %s319, %s33
          %s321 = sld [smem:[#allocation3 + %s320]]
          %s322 = smul.u32 2, %s32
          %p323 = scmp.lt.s32.totalorder %s321, 3
          %s324 = scalar_select %p323, %s321, 3
          %p325 = scmp.lt.s32.totalorder %s322, 1
          %s326 = scalar_select %p325, %s322, 1
          %s327 = smul.addr %s324, 2
          %s328 = sadd.s32 %s326, %s327
          %s329 = scalar_lea.vmem %s5, %s328
          %s330 = smul.u32 %s31, 4
          %s331 = sadd.s32 %s330, %s33
          %s332 = sld [smem:[#allocation3 + %s331]]
          %s333 = smul.u32 2, %s32
        $region32: #{moe_forward.1} parent=19 // pred_fallthru
          _
        // Predicated region
        $region33: #{moe_forward.1} parent=19 // pred_check
          %p334 = pneg %p193
        $region34: #{moe_forward.1} parent=19 // pred_check_branch
          %336 = sbr.rel (%p334) target = $region36
        $region35: #{moe_forward.1} parent=19 // pred_region
          %s337 = smul.u32 %s31, 4
          %s338 = sadd.s32 %s337, %s33
          %s339 = sld [smem:[#allocation3 + %s338]]
          %s340 = smul.u32 32, %s32
          %p341 = scmp.lt.s32.totalorder %s339, 3
          %s342 = scalar_select %p341, %s339, 3
          %p343 = scmp.lt.s32.totalorder %s340, 31
          %s344 = scalar_select %p343, %s340, 31
          %s345 = smul.addr %s342, 32
          %s346 = sadd.s32 %s344, %s345
          %s347 = smul.addr %s346, 4
          %s348 = scalar_lea.vmem %s6, %s347
          %s349 = smul.u32 %s31, 4
          %s350 = sadd.s32 %s349, %s33
          %s351 = sld [smem:[#allocation3 + %s350]]
          %s352 = smul.u32 32, %s32
        $region36: #{moe_forward.1} parent=19 // pred_fallthru
          _
        // Predicated region
        $region37: #{moe_forward.1} parent=19 // pred_check
          %p353 = pneg %p225
        $region38: #{moe_forward.1} parent=19 // pred_check_branch
          %355 = sbr.rel (%p353) target = $region40
        $region39: #{moe_forward.1} parent=19 // pred_region
          %s356 = smul.u32 %s31, 4
          %s357 = sadd.s32 %s356, %s33
          %s358 = sld [smem:[#allocation3 + %s357]]
          %p359 = scmp.lt.s32.totalorder %s358, 3
          %s360 = scalar_select %p359, %s358, 3
          %s361 = scalar_lea.vmem %s7, %s360
          %s362 = smul.u32 %s31, 4
          %s363 = sadd.s32 %s362, %s33
          %s364 = sld [smem:[#allocation3 + %s363]]
        $region40: #{moe_forward.1} parent=19 // pred_fallthru
          _
      $region20: #{moe_forward.1} parent=5 // pred_fallthru
        _
      %p365 = scmp.le.s32.totalorder 1, %s24
      %p366 = scmp.lt.s32.totalorder %s24, 5
      %p367 = pnand %p365, %p366
      %p368 = pneg %p367
      // Predicated region
      $region41: #{moe_forward.1} parent=5 // pred_check
        _
      $region42: #{moe_forward.1} parent=5 // pred_check_branch
        %370 = sbr.rel (%p367) target = $region44
      $region43: #{moe_forward.1} parent=5 // pred_region
        %s371 = ssub.s32 %s24, 1
        %s372 = smul.u32 2, %s34
        %p373 = scmp.lt.s32.totalorder %s372, 1
        %s374 = scalar_select %p373, %s372, 1
        %s375 = smul.addr %s374, 8
        %s376 = scalar_lea.vmem %s2, %s375
        %p377 = pneg %p69
        %p378 = pneg %p66
        %p379 = scmp.lt.s32.totalorder %s34, 0
        %s380 = scalar_select %p379, %s34, 0
        %p381 = scmp.lt.s32.totalorder %s36, 3
        %s382 = scalar_select %p381, %s36, 3
        %s383 = smul.addr %s382, 2
        %s384 = smul.addr %s380, 8
        %s385 = sadd.s32 %s383, %s384
        %s386 = smul.addr %s385, 8
        %s387 = scalar_lea.vmem %s3, %s386
        %p388 = pneg %p97
        %p389 = pneg %p94
        %s390 = smul.u32 %s34, 4
        %s391 = sadd.s32 %s390, %s36
        %s392 = sld [smem:[#allocation3 + %s391]]
        %s393 = smul.u32 2, %s35
        %p394 = scmp.lt.s32.totalorder %s392, 3
        %s395 = scalar_select %p394, %s392, 3
        %p396 = scmp.lt.s32.totalorder %s393, 1
        %s397 = scalar_select %p396, %s393, 1
        %s398 = smul.addr %s395, 32
        %s399 = sadd.s32 %s397, %s398
        %s400 = smul.addr %s399, 4
        %s401 = scalar_lea.vmem %s4, %s400
        %p402 = pneg %p131
        %p403 = pneg %p128
        %s404 = smul.u32 %s34, 4
        %s405 = sadd.s32 %s404, %s36
        %s406 = sld [smem:[#allocation3 + %s405]]
        %s407 = smul.u32 2, %s35
        %p408 = scmp.lt.s32.totalorder %s406, 3
        %s409 = scalar_select %p408, %s406, 3
        %p410 = scmp.lt.s32.totalorder %s407, 1
        %s411 = scalar_select %p410, %s407, 1
        %s412 = smul.addr %s409, 2
        %s413 = sadd.s32 %s411, %s412
        %s414 = scalar_lea.vmem %s5, %s413
        %p415 = pneg %p165
        %p416 = pneg %p162
        %s417 = smul.u32 %s34, 4
        %s418 = sadd.s32 %s417, %s36
        %s419 = sld [smem:[#allocation3 + %s418]]
        %s420 = smul.u32 32, %s35
        %p421 = scmp.lt.s32.totalorder %s419, 3
        %s422 = scalar_select %p421, %s419, 3
        %p423 = scmp.lt.s32.totalorder %s420, 31
        %s424 = scalar_select %p423, %s420, 31
        %s425 = smul.addr %s422, 32
        %s426 = sadd.s32 %s424, %s425
        %s427 = smul.addr %s426, 4
        %s428 = scalar_lea.vmem %s6, %s427
        %p429 = pneg %p199
        %p430 = pneg %p196
        %s431 = smul.u32 %s34, 4
        %s432 = sadd.s32 %s431, %s36
        %s433 = sld [smem:[#allocation3 + %s432]]
        %p434 = scmp.lt.s32.totalorder %s433, 3
        %s435 = scalar_select %p434, %s433, 3
        %s436 = scalar_lea.vmem %s7, %s435
        %p437 = pneg %p231
        %p438 = pneg %p228
        %p439 = pneg %p257
        %p440 = pneg %p254
        %s441 = smul.u32 2, %s34
        %p442 = scmp.lt.s32.totalorder %s441, 1
        %s443 = scalar_select %p442, %s441, 1
        %s444 = smul.addr %s443, 8
        %s445 = scalar_lea.vmem %s2, %s444
        %s446 = smul.u32 2, %s34
        %p447 = scmp.lt.s32.totalorder %s34, 0
        %s448 = scalar_select %p447, %s34, 0
        %p449 = scmp.lt.s32.totalorder %s36, 3
        %s450 = scalar_select %p449, %s36, 3
        %s451 = smul.addr %s450, 2
        %s452 = smul.addr %s448, 8
        %s453 = sadd.s32 %s451, %s452
        %s454 = smul.addr %s453, 8
        %s455 = scalar_lea.vmem %s3, %s454
        %s456 = smul.u32 %s34, 4
        %s457 = sadd.s32 %s456, %s36
        %s458 = sld [smem:[#allocation3 + %s457]]
        %s459 = smul.u32 2, %s35
        %p460 = scmp.lt.s32.totalorder %s458, 3
        %s461 = scalar_select %p460, %s458, 3
        %p462 = scmp.lt.s32.totalorder %s459, 1
        %s463 = scalar_select %p462, %s459, 1
        %s464 = smul.addr %s461, 32
        %s465 = sadd.s32 %s463, %s464
        %s466 = smul.addr %s465, 4
        %s467 = scalar_lea.vmem %s4, %s466
        %s468 = smul.u32 %s34, 4
        %s469 = sadd.s32 %s468, %s36
        %s470 = sld [smem:[#allocation3 + %s469]]
        %s471 = smul.u32 2, %s35
        %s472 = smul.u32 %s34, 4
        %s473 = sadd.s32 %s472, %s36
        %s474 = sld [smem:[#allocation3 + %s473]]
        %s475 = smul.u32 2, %s35
        %p476 = scmp.lt.s32.totalorder %s474, 3
        %s477 = scalar_select %p476, %s474, 3
        %p478 = scmp.lt.s32.totalorder %s475, 1
        %s479 = scalar_select %p478, %s475, 1
        %s480 = smul.addr %s477, 2
        %s481 = sadd.s32 %s479, %s480
        %s482 = scalar_lea.vmem %s5, %s481
        %s483 = smul.u32 %s34, 4
        %s484 = sadd.s32 %s483, %s36
        %s485 = sld [smem:[#allocation3 + %s484]]
        %s486 = smul.u32 2, %s35
        %s487 = smul.u32 %s34, 4
        %s488 = sadd.s32 %s487, %s36
        %s489 = sld [smem:[#allocation3 + %s488]]
        %s490 = smul.u32 32, %s35
        %p491 = scmp.lt.s32.totalorder %s489, 3
        %s492 = scalar_select %p491, %s489, 3
        %p493 = scmp.lt.s32.totalorder %s490, 31
        %s494 = scalar_select %p493, %s490, 31
        %s495 = smul.addr %s492, 32
        %s496 = sadd.s32 %s494, %s495
        %s497 = smul.addr %s496, 4
        %s498 = scalar_lea.vmem %s6, %s497
        %s499 = smul.u32 %s34, 4
        %s500 = sadd.s32 %s499, %s36
        %s501 = sld [smem:[#allocation3 + %s500]]
        %s502 = smul.u32 32, %s35
        %s503 = smul.u32 %s34, 4
        %s504 = sadd.s32 %s503, %s36
        %s505 = sld [smem:[#allocation3 + %s504]]
        %p506 = scmp.lt.s32.totalorder %s505, 3
        %s507 = scalar_select %p506, %s505, 3
        %s508 = scalar_lea.vmem %s7, %s507
        %s509 = smul.u32 %s34, 4
        %s510 = sadd.s32 %s509, %s36
        %s511 = sld [smem:[#allocation3 + %s510]]
        %s512 = smul.u32 2, %s34
        %p513 = scmp.eq.s32.totalorder %s35, 0
        %p514 = scmp.eq.s32.totalorder %s36, 0
        %p515 = pnand %p513, %p514
        %p516 = pneg %p515
        // Predicated region
        $region45: #{moe_forward.1} parent=43 // pred_check
          _
        $region46: #{moe_forward.1} parent=43 // pred_check_branch
          %518 = sbr.rel (%p515) target = $region48
        $region47: #{moe_forward.1} parent=43 // pred_region
          %519 = vst [vmem:[#allocation5] sm:$0xff] 0.0
          %520 = vst [vmem:[#allocation5 + $0x8] sm:$0xff] 0.0
        $region48: #{moe_forward.1} parent=43 // pred_fallthru
          _
        %s521 = sld [smem:[#allocation4 + %s34]]
        %p522 = scmp.lt.s32.totalorder %s36, %s521
        // Predicated region
        $region49: #{moe_forward.1} parent=43 // pred_check
          %p523 = pneg %p522
        $region50: #{moe_forward.1} parent=43 // pred_check_branch
          %525 = sbr.rel (%p523) target = $region52
        $region51: #{moe_forward.1} parent=43 // pred_region
          %v526 = vld [vmem:[%s445] sm:$0xff]
          %v527 = vld [vmem:[%s445 + $0x8] sm:$0xff]
          %v528 = vpack.c.bf16 %v527, %v526
          %v529 = vld [vmem:[%s455] sm:$0xff]
          %v530 = vld [vmem:[%s455 + $0x8] sm:$0xff]
          %v531 = vld [vmem:[%s467] sm:$0xff]
          %v532 = vld [vmem:[%s467 + $0x8] sm:$0xff]
          %v533 = vld [vmem:[%s467 + $0x10] sm:$0xff]
          %v534 = vld [vmem:[%s467 + $0x18] sm:$0xff]
          %v535 = vld [vmem:[%s467 + $0x20] sm:$0xff]
          %v536 = vld [vmem:[%s467 + $0x28] sm:$0xff]
          %v537 = vld [vmem:[%s467 + $0x30] sm:$0xff]
          %v538 = vld [vmem:[%s467 + $0x38] sm:$0xff]
          %v539 = vld [vmem:[%s467 + $0x40] sm:$0xff]
          %v540 = vld [vmem:[%s467 + $0x48] sm:$0xff]
          %v541 = vld [vmem:[%s467 + $0x50] sm:$0xff]
          %v542 = vld [vmem:[%s467 + $0x58] sm:$0xff]
          %v543 = vld [vmem:[%s467 + $0x60] sm:$0xff]
          %v544 = vld [vmem:[%s467 + $0x68] sm:$0xff]
          %v545 = vld [vmem:[%s467 + $0x70] sm:$0xff]
          %v546 = vld [vmem:[%s467 + $0x78] sm:$0xff]
          %v547 = vld [vmem:[%s482] sm:$0x3]
          %v549 = vperm.slane %v547, 0
          %v550 = vperm.slane %v547, 1
          %v569 = vunpack.c.l.b16 %v531
          %v570 = vunpack.c.h.b16 %v531
          %v571 = vunpack.c.l.b16 %v532
          %v572 = vunpack.c.h.b16 %v532
          %v573 = vunpack.c.l.b16 %v533
          %v574 = vunpack.c.h.b16 %v533
          %v575 = vunpack.c.l.b16 %v534
          %v576 = vunpack.c.h.b16 %v534
          %v577 = vunpack.c.l.b16 %v535
          %v578 = vunpack.c.h.b16 %v535
          %v579 = vunpack.c.l.b16 %v536
          %v580 = vunpack.c.h.b16 %v536
          %v581 = vunpack.c.l.b16 %v537
          %v582 = vunpack.c.h.b16 %v537
          %v583 = vunpack.c.l.b16 %v538
          %v584 = vunpack.c.h.b16 %v538
          %v585 = vunpack.c.l.b16 %v539
          %v586 = vunpack.c.h.b16 %v539
          %v587 = vunpack.c.l.b16 %v540
          %v588 = vunpack.c.h.b16 %v540
          %v589 = vunpack.c.l.b16 %v541
          %v590 = vunpack.c.h.b16 %v541
          %v591 = vunpack.c.l.b16 %v542
          %v592 = vunpack.c.h.b16 %v542
          %v593 = vunpack.c.l.b16 %v543
          %v594 = vunpack.c.h.b16 %v543
          %v595 = vunpack.c.l.b16 %v544
          %v596 = vunpack.c.h.b16 %v544
          %v597 = vunpack.c.l.b16 %v545
          %v598 = vunpack.c.h.b16 %v545
          %v599 = vunpack.c.l.b16 %v546
          %v600 = vunpack.c.h.b16 %v546
          %v601 = vpack.c.b16 %v571, %v569
          %v602 = vpack.c.b16 %v572, %v570
          %v603 = vpack.c.b16 %v575, %v573
          %v604 = vpack.c.b16 %v576, %v574
          %v605 = vpack.c.b16 %v579, %v577
          %v606 = vpack.c.b16 %v580, %v578
          %v607 = vpack.c.b16 %v583, %v581
          %v608 = vpack.c.b16 %v584, %v582
          %v609 = vpack.c.b16 %v587, %v585
          %v610 = vpack.c.b16 %v588, %v586
          %v611 = vpack.c.b16 %v591, %v589
          %v612 = vpack.c.b16 %v592, %v590
          %v613 = vpack.c.b16 %v595, %v593
          %v614 = vpack.c.b16 %v596, %v594
          %v615 = vpack.c.b16 %v599, %v597
          %v616 = vpack.c.b16 %v600, %v598
          %633 = vmatpush.bf16.msra.mxu0 %v615
          %634 = vmatpush.bf16.msra.mxu0 %v613
          %635 = vmatpush.bf16.msra.mxu0 %v611
          %636 = vmatpush.bf16.msra.mxu0 %v609
          %637 = vmatpush.bf16.msra.mxu0 %v607
          %638 = vmatpush.bf16.msra.mxu0 %v605
          %639 = vmatpush.bf16.msra.mxu0 %v603
          %640 = vmatpush.bf16.msra.mxu0 %v601
          %641 = vmatmul.bf16.gmra.mxu0 %v528
          %v642 = vpop.f32.mrf.mxu0
          %v643 = vadd.f32 %v549, %v642
          %v644 = vpop.f32.mrf.mxu0
          %v645 = vadd.f32 %v549, %v644
          %646 = vdwg.mxu0
          %647 = vmatpush.bf16.msra.mxu0 %v616
          %648 = vmatpush.bf16.msra.mxu0 %v614
          %649 = vmatpush.bf16.msra.mxu0 %v612
          %650 = vmatpush.bf16.msra.mxu0 %v610
          %651 = vmatpush.bf16.msra.mxu0 %v608
          %652 = vmatpush.bf16.msra.mxu0 %v606
          %653 = vmatpush.bf16.msra.mxu0 %v604
          %654 = vmatpush.bf16.msra.mxu0 %v602
          %655 = vmatmul.bf16.gmra.mxu0 %v528
          %v656 = vpop.f32.mrf.mxu0
          %v657 = vadd.f32 %v550, %v656
          %v658 = vpop.f32.mrf.mxu0
          %v659 = vadd.f32 %v550, %v658
          %660 = vdwg.mxu0
          %v661 = vmax.f32 %v643, 0.0
          %v662 = vmax.f32 %v657, 0.0
          %v663 = vmax.f32 %v645, 0.0
          %v664 = vmax.f32 %v659, 0.0
          %v665 = vld [vmem:[#allocation5] sm:$0xff]
          %v666 = vld [vmem:[#allocation5 + $0x8] sm:$0xff]
          %v667 = vpack.c.bf16 %v663, %v661
          %v668 = vpack.c.bf16 %v664, %v662
          %v669 = vld [vmem:[%s498] sm:$0xf]
          %v670 = vld [vmem:[%s498 + $0x4] sm:$0xf]
          %v671 = vld [vmem:[%s498 + $0x8] sm:$0xf]
          %v672 = vld [vmem:[%s498 + $0xc] sm:$0xf]
          %v673 = vld [vmem:[%s498 + $0x10] sm:$0xf]
          %v674 = vld [vmem:[%s498 + $0x14] sm:$0xf]
          %v675 = vld [vmem:[%s498 + $0x18] sm:$0xf]
          %v676 = vld [vmem:[%s498 + $0x1c] sm:$0xf]
          %v677 = vld [vmem:[%s498 + $0x20] sm:$0xf]
          %v678 = vld [vmem:[%s498 + $0x24] sm:$0xf]
          %v679 = vld [vmem:[%s498 + $0x28] sm:$0xf]
          %v680 = vld [vmem:[%s498 + $0x2c] sm:$0xf]
          %v681 = vld [vmem:[%s498 + $0x30] sm:$0xf]
          %v682 = vld [vmem:[%s498 + $0x34] sm:$0xf]
          %v683 = vld [vmem:[%s498 + $0x38] sm:$0xf]
          %v684 = vld [vmem:[%s498 + $0x3c] sm:$0xf]
          %v685 = vld [vmem:[%s498 + $0x40] sm:$0xf]
          %v686 = vld [vmem:[%s498 + $0x44] sm:$0xf]
          %v687 = vld [vmem:[%s498 + $0x48] sm:$0xf]
          %v688 = vld [vmem:[%s498 + $0x4c] sm:$0xf]
          %v689 = vld [vmem:[%s498 + $0x50] sm:$0xf]
          %v690 = vld [vmem:[%s498 + $0x54] sm:$0xf]
          %v691 = vld [vmem:[%s498 + $0x58] sm:$0xf]
          %v692 = vld [vmem:[%s498 + $0x5c] sm:$0xf]
          %v693 = vld [vmem:[%s498 + $0x60] sm:$0xf]
          %v694 = vld [vmem:[%s498 + $0x64] sm:$0xf]
          %v695 = vld [vmem:[%s498 + $0x68] sm:$0xf]
          %v696 = vld [vmem:[%s498 + $0x6c] sm:$0xf]
          %v697 = vld [vmem:[%s498 + $0x70] sm:$0xf]
          %v698 = vld [vmem:[%s498 + $0x74] sm:$0xf]
          %v699 = vld [vmem:[%s498 + $0x78] sm:$0xf]
          %v700 = vld [vmem:[%s498 + $0x7c] sm:$0xf]
          %v733 = vunpack.c.l.b16 %v669
          %v734 = vunpack.c.l.b16 %v670
          %v735 = vunpack.c.l.b16 %v671
          %v736 = vunpack.c.l.b16 %v672
          %v737 = vunpack.c.l.b16 %v673
          %v738 = vunpack.c.l.b16 %v674
          %v739 = vunpack.c.l.b16 %v675
          %v740 = vunpack.c.l.b16 %v676
          %v741 = vunpack.c.l.b16 %v677
          %v742 = vunpack.c.l.b16 %v678
          %v743 = vunpack.c.l.b16 %v679
          %v744 = vunpack.c.l.b16 %v680
          %v745 = vunpack.c.l.b16 %v681
          %v746 = vunpack.c.l.b16 %v682
          %v747 = vunpack.c.l.b16 %v683
          %v748 = vunpack.c.l.b16 %v684
          %v749 = vunpack.c.l.b16 %v685
          %v750 = vunpack.c.l.b16 %v686
          %v751 = vunpack.c.l.b16 %v687
          %v752 = vunpack.c.l.b16 %v688
          %v753 = vunpack.c.l.b16 %v689
          %v754 = vunpack.c.l.b16 %v690
          %v755 = vunpack.c.l.b16 %v691
          %v756 = vunpack.c.l.b16 %v692
          %v757 = vunpack.c.l.b16 %v693
          %v758 = vunpack.c.l.b16 %v694
          %v759 = vunpack.c.l.b16 %v695
          %v760 = vunpack.c.l.b16 %v696
          %v761 = vunpack.c.l.b16 %v697
          %v762 = vunpack.c.l.b16 %v698
          %v763 = vunpack.c.l.b16 %v699
          %v764 = vunpack.c.l.b16 %v700
          %v765 = vpack.c.b16 %v734, %v733
          %v766 = vpack.c.b16 %v736, %v735
          %v767 = vpack.c.b16 %v738, %v737
          %v768 = vpack.c.b16 %v740, %v739
          %v769 = vpack.c.b16 %v742, %v741
          %v770 = vpack.c.b16 %v744, %v743
          %v771 = vpack.c.b16 %v746, %v745
          %v772 = vpack.c.b16 %v748, %v747
          %v773 = vpack.c.b16 %v750, %v749
          %v774 = vpack.c.b16 %v752, %v751
          %v775 = vpack.c.b16 %v754, %v753
          %v776 = vpack.c.b16 %v756, %v755
          %v777 = vpack.c.b16 %v758, %v757
          %v778 = vpack.c.b16 %v760, %v759
          %v779 = vpack.c.b16 %v762, %v761
          %v780 = vpack.c.b16 %v764, %v763
          %797 = vmatpush.bf16.msra.mxu0 %v772
          %798 = vmatpush.bf16.msra.mxu0 %v771
          %799 = vmatpush.bf16.msra.mxu0 %v770
          %800 = vmatpush.bf16.msra.mxu0 %v769
          %801 = vmatpush.bf16.msra.mxu0 %v768
          %802 = vmatpush.bf16.msra.mxu0 %v767
          %803 = vmatpush.bf16.msra.mxu0 %v766
          %804 = vmatpush.bf16.msra.mxu0 %v765
          %805 = vmatmul.bf16.gmra.mxu0 %v667
          %v806 = vpop.f32.mrf.mxu0
          %v807 = vadd.f32 0.0, %v806
          %v808 = vpop.f32.mrf.mxu0
          %v809 = vadd.f32 0.0, %v808
          %810 = vdwg.mxu0
          %811 = vmatpush.bf16.msra.mxu0 %v780
          %812 = vmatpush.bf16.msra.mxu0 %v779
          %813 = vmatpush.bf16.msra.mxu0 %v778
          %814 = vmatpush.bf16.msra.mxu0 %v777
          %815 = vmatpush.bf16.msra.mxu0 %v776
          %816 = vmatpush.bf16.msra.mxu0 %v775
          %817 = vmatpush.bf16.msra.mxu0 %v774
          %818 = vmatpush.bf16.msra.mxu0 %v773
          %819 = vmatmul.bf16.gmra.mxu0 %v668
          %v820 = vpop.f32.mrf.mxu0
          %v821 = vadd.f32 %v807, %v820
          %v822 = vpop.f32.mrf.mxu0
          %v823 = vadd.f32 %v809, %v822
          %824 = vdwg.mxu0
          %826 = vset.pattern.permute.xlu0 0
          %827 = vperm.xlu0 %826, %v529
          %v828 = vpop.permute.xlu0 %827
          %831 = vset.pattern.permute.xlu0 0
          %832 = vperm.xlu0 %831, %v530
          %v833 = vpop.permute.xlu0 %832
          %v835 = vmul.f32 %v828, %v821
          %v836 = vmul.f32 %v833, %v823
          %v837 = vadd.f32 %v665, %v835
          %v838 = vadd.f32 %v666, %v836
          %839 = vst [vmem:[#allocation5] sm:$0xff] %v837
          %840 = vst [vmem:[#allocation5 + $0x8] sm:$0xff] %v838
        $region52: #{moe_forward.1} parent=43 // pred_fallthru
          _
        %p841 = pnand %p522, %p513
        %p842 = pneg %p841
        // Predicated region
        $region53: #{moe_forward.1} parent=43 // pred_check
          _
        $region54: #{moe_forward.1} parent=43 // pred_check_branch
          %844 = sbr.rel (%p841) target = $region56
        $region55: #{moe_forward.1} parent=43 // pred_region
          %v845 = vld [vmem:[#allocation5] sm:$0xff]
          %v846 = vld [vmem:[#allocation5 + $0x8] sm:$0xff]
          %v847 = vld [vmem:[%s455] sm:$0xff]
          %v848 = vld [vmem:[%s455 + $0x8] sm:$0xff]
          %v849 = vld [vmem:[%s508] sm:$0x1]
          %851 = vset.pattern.permute.xlu0 0
          %852 = vperm.xlu0 %851, %v847
          %v853 = vpop.permute.xlu0 %852
          %856 = vset.pattern.permute.xlu0 0
          %857 = vperm.xlu0 %856, %v848
          %v858 = vpop.permute.xlu0 %857
          %v861 = vperm.slane %v849, 0
          %v863 = vmul.f32 %v853, %v861
          %v864 = vmul.f32 %v858, %v861
          %v865 = vadd.f32 %v845, %v863
          %v866 = vadd.f32 %v846, %v864
          %867 = vst [vmem:[#allocation5] sm:$0xff] %v865
          %868 = vst [vmem:[#allocation5 + $0x8] sm:$0xff] %v866
        $region56: #{moe_forward.1} parent=43 // pred_fallthru
          _
        %p869 = scmp.eq.s32.totalorder %s36, 3
        %p870 = pnand %p513, %p869
        %p871 = pneg %p870
        // Predicated region
        $region57: #{moe_forward.1} parent=43 // pred_check
          _
        $region58: #{moe_forward.1} parent=43 // pred_check_branch
          %873 = sbr.rel (%p870) target = $region60
        $region59: #{moe_forward.1} parent=43 // pred_region
          %v874 = vld [vmem:[#allocation5] sm:$0xff]
          %v875 = vld [vmem:[#allocation5 + $0x8] sm:$0xff]
          %vm876 = vcmp.eq.f32.partialorder %v874, 0.0
          %vm877 = vcmp.eq.f32.partialorder %v875, 0.0
          %v878 = vsel %vm876, 2.220446e-16, %v874
          %v879 = vsel %vm877, 2.220446e-16, %v875
          %880 = vst [vmem:[#allocation5] sm:$0xff] %v878
          %881 = vst [vmem:[#allocation5 + $0x8] sm:$0xff] %v879
        $region60: #{moe_forward.1} parent=43 // pred_fallthru
          _
        // Predicated region
        $region61: #{moe_forward.1} parent=43 // pred_check
          %p882 = pneg %p254
        $region62: #{moe_forward.1} parent=43 // pred_check_branch
          %884 = sbr.rel (%p882) target = $region64
        $region63: #{moe_forward.1} parent=43 // pred_region
          %s885 = smul.u32 2, %s34
          %887 = vsyncadd [#allocation6], 0
          %s888 = smul.addr %s885, 8
          %s889 = scalar_lea.hbm %s8, %s888
          %s890 = sshll.u32 [#allocation5], 4
          %s891 = int_to_ptr.vmem [resolvable:$true] %s890
          %s892 = sshll.u32 %s889, 4
          %s893 = int_to_ptr.hbm [resolvable:$true] %s892
          %898 = dma.vmem_to_hbm [thread:$0]  %s891, 256, %s893, [#allocation6], 128, 128, 8
        $region64: #{moe_forward.1} parent=43 // pred_fallthru
          _
        // Predicated region
        $region65: #{moe_forward.1} parent=43 // pred_check
          %p899 = pneg %p254
        $region66: #{moe_forward.1} parent=43 // pred_check_branch
          %901 = sbr.rel (%p899) target = $region68
        $region67: #{moe_forward.1} parent=43 // pred_region
          %903 = dma.done [#allocation6], 256
        $region68: #{moe_forward.1} parent=43 // pred_fallthru
          _
      $region44: #{moe_forward.1} parent=5 // pred_fallthru
        _
      %p904 = scmp.le.s32.totalorder 2, %s24
      // Predicated region
      $region69: #{moe_forward.1} parent=5 // pred_check
        %p905 = pneg %p904
      $region70: #{moe_forward.1} parent=5 // pred_check_branch
        %907 = sbr.rel (%p905) target = $region72
      $region71: #{moe_forward.1} parent=5 // pred_region
        %s908 = ssub.s32 %s24, 2
      $region72: #{moe_forward.1} parent=5 // pred_fallthru
        _
    $region6: #{moe_forward.1} parent=1 // loop_footer
      %s28 = sadd.s32 1, %s24
    $region7: #{moe_forward.1} parent=1 // loop_footer_branch
      %23 = sbr.rel target = $region3
    $region8: #{moe_forward.1} parent=1 // loop_exit
      _
    %909 = vsyncpa [#allocation6], 1
    %s910 = scalar_lea.sflag [#allocation6], 1
    %911 = vsyncpa %s910, 1

</llo_original>
